<compile_context>
chip_gen: v7x
topology: tpu7x:2x2x1
jax: 0.10.0
libtpu: 0.0.40
codegen_flags: <defaults>
</compile_context>

<pallas_src>
import jax
import jax.numpy as jnp
from jax.experimental import pallas as pl
from jax.experimental.pallas import tpu as pltpu

H = 128  # hidden width of the discriminator


def _round_up(a, m):
    return ((a + m - 1) // m) * m


def discriminator_kernel(x_ref, w1_ref, b1_ref, w2_ref, b2_ref, w3t_ref, b3_ref, o_ref):
    # x streams over the batch grid as f32 tiles; cast to bf16 in-kernel.
    # Weights/biases use constant block indices -> stay VMEM-resident.
    x = x_ref[...].astype(jnp.bfloat16)                                   # (TB, D)

    # layer 1: (TB, D) @ (D, H), f32 accumulation; LeakyReLU(0.2) = max(x, 0.2x)
    h1 = jnp.dot(x, w1_ref[...], preferred_element_type=jnp.float32) + b1_ref[...]
    h1 = jnp.maximum(h1, 0.2 * h1)

    # layer 2: (TB, H) @ (H, H)
    h2 = jnp.dot(h1.astype(jnp.bfloat16), w2_ref[...],
                 preferred_element_type=jnp.float32) + b2_ref[...]
    h2 = jnp.maximum(h2, 0.2 * h2)

    # layer 3: contract the single w3 column against h2 with the batch dim
    # landing in lanes -> lane-dense (1, TB) result (no 128-wide zero padding,
    # no masked column stores).  w3t_ref holds w3 transposed to (1, H).
    h3 = jax.lax.dot_general(
        w3t_ref[...], h2.astype(jnp.bfloat16),
        dimension_numbers=(((1,), (1,)), ((), ())),
        preferred_element_type=jnp.float32) + b3_ref[...]                 # (1, TB)

    # sigmoid via EUP exp + approximate reciprocal (keeps the divide off the VPU)
    o_ref[0] = pl.reciprocal(1.0 + jnp.exp(-h3), approx=True)


def discriminator_forward(x, params, *, tb_max=512):
    """x: (B, input_dim) float32.

    params: w1 (D,H), b1 (1,H), w2 (H,H), b2 (1,H), w3 (H,1), b3 (1,1)
    (PyTorch nn.Linear weights already transposed to (in, out))."""
    B, D = x.shape
    w1, b1 = params["w1"], params["b1"]
    w2, b2 = params["w2"], params["b2"]
    w3, b3 = params["w3"], params["b3"]

    # Batch tile: multiple of 8 sublanes, capped at tb_max, sized so the grid
    # has >= 2 tiles when the batch allows (v7x 2-TC sharding) with minimal
    # padding waste.
    TB = min(tb_max, max(8, _round_up(pl.cdiv(B, 2), 8)))
    Bp = _round_up(B, TB)
    nb = Bp // TB
    if Bp != B:
        x = jnp.pad(x, ((0, Bp - B), (0, 0)))   # padded rows are sliced off below

    # bf16 MXU weights; biases stay f32 (epilogue kept f32: v5e has no bf16 VPU).
    w1b = w1.astype(jnp.bfloat16)
    w2b = w2.astype(jnp.bfloat16)
    w3t = w3.T.astype(jnp.bfloat16)              # (1, H): lane-dense last layer
    b3s = b3.reshape(1, 1).astype(jnp.float32)

    flops = 2 * Bp * (D * H + H * H + H)
    bytes_accessed = (Bp * D * 4 + w1b.size * 2 + w2b.size * 2 + w3t.size * 2
                      + b1.size * 4 + b2.size * 4 + 4 + Bp * 4)

    out = pl.pallas_call(
        discriminator_kernel,
        out_shape=jax.ShapeDtypeStruct((nb, 1, TB), jnp.float32),
        grid=(nb,),
        in_specs=[
            pl.BlockSpec((TB, D), lambda i: (i, 0)),    # streamed x tiles (double-buffered)
            pl.BlockSpec((D, H), lambda i: (0, 0)),     # weights/biases: constant block index
            pl.BlockSpec((1, H), lambda i: (0, 0)),
            pl.BlockSpec((H, H), lambda i: (0, 0)),
            pl.BlockSpec((1, H), lambda i: (0, 0)),
            pl.BlockSpec((1, H), lambda i: (0, 0)),
            pl.BlockSpec((1, 1), lambda i: (0, 0)),
        ],
        out_specs=pl.BlockSpec((1, 1, TB), lambda i: (i, 0, 0)),
        compiler_params=pltpu.CompilerParams(
            dimension_semantics=("parallel",)),
        cost_estimate=pl.CostEstimate(
            flops=flops, transcendentals=Bp, bytes_accessed=bytes_accessed),
    )(x, w1b, b1, w2b, b2, w3t, b3s)

    # (nb, 1, TB) -> (Bp,) row-major -> (B, 1)
    return out.reshape(Bp)[:B].reshape(B, 1)


def init_params(key, input_dim, h=H):
    k1, k2, k3, k4, k5, k6 = jax.random.split(key, 6)

    # PyTorch-Linear-like uniform init U(-1/sqrt(fan_in), 1/sqrt(fan_in)), stored
    # as (in, out) so the kernel computes x @ W + b.
    def lin(kw, kb, fan_in, fan_out):
        bound = 1.0 / jnp.sqrt(fan_in)
        w = jax.random.uniform(kw, (fan_in, fan_out), jnp.float32, -bound, bound)
        b = jax.random.uniform(kb, (1, fan_out), jnp.float32, -bound, bound)
        return w, b

    w1, b1 = lin(k1, k2, input_dim, h)
    w2, b2 = lin(k3, k4, h, h)
    w3, b3 = lin(k5, k6, h, 1)
    return {"w1": w1, "b1": b1, "w2": w2, "b2": b2, "w3": w3, "b3": b3}


def reference_forward(x, p):
    h1 = x @ p["w1"] + p["b1"]
    h1 = jnp.where(h1 > 0, h1, 0.2 * h1)
    h2 = h1 @ p["w2"] + p["b2"]
    h2 = jnp.where(h2 > 0, h2, 0.2 * h2)
    h3 = h2 @ p["w3"] + p["b3"]
    return jax.nn.sigmoid(h3)


if __name__ == "__main__":
    key = jax.random.PRNGKey(0)
    kx, kp = jax.random.split(key)

    B, input_dim = 24, 32   # exercises a 2-tile grid with a ragged (padded) batch
    x = jax.random.normal(kx, (B, input_dim), jnp.float32)
    params = init_params(kp, input_dim)

    out = discriminator_forward(x, params)
    out = jax.block_until_ready(out)

    ref = reference_forward(x, params)
    assert out.shape == (B, 1)
    # bf16 MXU operands (f32 accumulation) + approx reciprocal -> loose tolerance.
    assert jnp.allclose(out, ref, atol=1.5e-2, rtol=0.0), "mismatch vs JAX reference"

    print("KERNEL_OK")
</pallas_src>

<mosaic_0001>
module attributes {stable_mosaic.version = 11 : i64} {
  func.func @discriminator_kernel(%arg0: i32, %arg1: memref<16x32xf32, #tpu.memory_space<vmem>>, %arg2: memref<32x128xbf16, #tpu.memory_space<vmem>>, %arg3: memref<1x128xf32, #tpu.memory_space<vmem>>, %arg4: memref<128x128xbf16, #tpu.memory_space<vmem>>, %arg5: memref<1x128xf32, #tpu.memory_space<vmem>>, %arg6: memref<1x128xbf16, #tpu.memory_space<vmem>>, %arg7: memref<1x1xf32, #tpu.memory_space<vmem>>, %arg8: memref<1x1x16xf32, #tpu.memory_space<vmem>>) attributes {dimension_semantics = [#tpu.dimension_semantics<parallel>], iteration_bounds = array<i64: 2>, scalar_prefetch = 0 : i64, scratch_operands = 0 : i64, tpu.core_type = #tpu.core_type<tc>, window_params = [{transform_indices = @transform_0, window_bounds = array<i64: 16, 32>}, {pipeline_mode = #tpu.pipeline_mode<synchronous>, transform_indices = @transform_1, window_bounds = array<i64: 32, 128>}, {pipeline_mode = #tpu.pipeline_mode<synchronous>, transform_indices = @transform_2, window_bounds = array<i64: 1, 128>}, {pipeline_mode = #tpu.pipeline_mode<synchronous>, transform_indices = @transform_3, window_bounds = array<i64: 128, 128>}, {pipeline_mode = #tpu.pipeline_mode<synchronous>, transform_indices = @transform_4, window_bounds = array<i64: 1, 128>}, {pipeline_mode = #tpu.pipeline_mode<synchronous>, transform_indices = @transform_5, window_bounds = array<i64: 1, 128>}, {pipeline_mode = #tpu.pipeline_mode<synchronous>, transform_indices = @transform_6, window_bounds = array<i64: 1, 1>}, {transform_indices = @transform_7, window_bounds = array<i64: 1, 1, 16>}]} {
    %c0 = arith.constant 0 : index
    %c0_0 = arith.constant 0 : index
    %0 = vector.load %arg1[%c0, %c0_0] : memref<16x32xf32, #tpu.memory_space<vmem>>, vector<16x32xf32>
    %1 = arith.truncf %0 : vector<16x32xf32> to vector<16x32xbf16>
    %c0_1 = arith.constant 0 : index
    %c0_2 = arith.constant 0 : index
    %2 = vector.load %arg2[%c0_1, %c0_2] : memref<32x128xbf16, #tpu.memory_space<vmem>>, vector<32x128xbf16>
    %cst = arith.constant dense<0.000000e+00> : vector<16x128xf32>
    %3 = tpu.matmul %1, %2, %cst {dimension_numbers = #tpu.dot_dimension_numbers<[1], [0], [0], [1], [0, 0, 1, 1], [], []>} : vector<16x32xbf16>, vector<32x128xbf16>, vector<16x128xf32> -> vector<16x128xf32>
    %c0_3 = arith.constant 0 : index
    %c0_4 = arith.constant 0 : index
    %4 = vector.load %arg3[%c0_3, %c0_4] : memref<1x128xf32, #tpu.memory_space<vmem>>, vector<1x128xf32>
    %5 = vector.broadcast %4 : vector<1x128xf32> to vector<16x128xf32>
    %6 = arith.addf %3, %5 : vector<16x128xf32>
    %cst_5 = arith.constant 2.000000e-01 : f32
    %7 = vector.broadcast %cst_5 : f32 to vector<16x128xf32>
    %8 = arith.mulf %7, %6 : vector<16x128xf32>
    %9 = arith.maximumf %6, %8 : vector<16x128xf32>
    %10 = arith.truncf %9 : vector<16x128xf32> to vector<16x128xbf16>
    %c0_6 = arith.constant 0 : index
    %c0_7 = arith.constant 0 : index
    %11 = vector.load %arg4[%c0_6, %c0_7] : memref<128x128xbf16, #tpu.memory_space<vmem>>, vector<128x128xbf16>
    %cst_8 = arith.constant dense<0.000000e+00> : vector<16x128xf32>
    %12 = tpu.matmul %10, %11, %cst_8 {dimension_numbers = #tpu.dot_dimension_numbers<[1], [0], [0], [1], [0, 0, 1, 1], [], []>} : vector<16x128xbf16>, vector<128x128xbf16>, vector<16x128xf32> -> vector<16x128xf32>
    %c0_9 = arith.constant 0 : index
    %c0_10 = arith.constant 0 : index
    %13 = vector.load %arg5[%c0_9, %c0_10] : memref<1x128xf32, #tpu.memory_space<vmem>>, vector<1x128xf32>
    %14 = vector.broadcast %13 : vector<1x128xf32> to vector<16x128xf32>
    %15 = arith.addf %12, %14 : vector<16x128xf32>
    %cst_11 = arith.constant 2.000000e-01 : f32
    %16 = vector.broadcast %cst_11 : f32 to vector<16x128xf32>
    %17 = arith.mulf %16, %15 : vector<16x128xf32>
    %18 = arith.maximumf %15, %17 : vector<16x128xf32>
    %c0_12 = arith.constant 0 : index
    %c0_13 = arith.constant 0 : index
    %19 = vector.load %arg6[%c0_12, %c0_13] : memref<1x128xbf16, #tpu.memory_space<vmem>>, vector<1x128xbf16>
    %20 = arith.truncf %18 : vector<16x128xf32> to vector<16x128xbf16>
    %cst_14 = arith.constant dense<0.000000e+00> : vector<1x16xf32>
    %21 = tpu.matmul %19, %20, %cst_14 {dimension_numbers = #tpu.dot_dimension_numbers<[1], [1], [0], [0], [0, 0, 1, 0], [], []>} : vector<1x128xbf16>, vector<16x128xbf16>, vector<1x16xf32> -> vector<1x16xf32>
    %c0_15 = arith.constant 0 : index
    %c0_16 = arith.constant 0 : index
    %22 = vector.load %arg7[%c0_15, %c0_16] : memref<1x1xf32, #tpu.memory_space<vmem>>, vector<1x1xf32>
    %23 = vector.broadcast %22 : vector<1x1xf32> to vector<1x16xf32>
    %24 = arith.addf %21, %23 : vector<1x16xf32>
    %cst_17 = arith.constant 0.000000e+00 : f32
    %25 = vector.broadcast %cst_17 : f32 to vector<1x16xf32>
    %26 = arith.subf %25, %24 : vector<1x16xf32>
    %27 = math.exp %26 : vector<1x16xf32>
    %cst_18 = arith.constant 1.000000e+00 : f32
    %28 = vector.broadcast %cst_18 : f32 to vector<1x16xf32>
    %29 = arith.addf %28, %27 : vector<1x16xf32>
    %30 = tpu.reciprocal %29 {approx = true} : vector<1x16xf32> -> vector<1x16xf32>
    %c0_19 = arith.constant 0 : index
    %c0_20 = arith.constant 0 : index
    %c0_21 = arith.constant 0 : index
    %31 = vector.load %arg8[%c0_19, %c0_20, %c0_21] : memref<1x1x16xf32, #tpu.memory_space<vmem>>, vector<1x1x16xf32>
    %32 = vector.shape_cast %31 : vector<1x1x16xf32> to vector<1x16xf32>
    %33 = vector.shape_cast %30 : vector<1x16xf32> to vector<1x1x16xf32>
    tpu.vector_store %arg8[%c0_19, %c0_20, %c0_21], %33 {strides = array<i32>} : memref<1x1x16xf32, #tpu.memory_space<vmem>>, vector<1x1x16xf32>,
    return
  }
  func.func @transform_0(%arg0: i32) -> (i32, i32) {
    %c0_i32 = arith.constant 0 : i32
    %c0_i32_0 = arith.constant 0 : i32
    return %arg0, %c0_i32 : i32, i32
  }
  func.func @transform_1(%arg0: i32) -> (i32, i32) {
    %c0_i32 = arith.constant 0 : i32
    %c0_i32_0 = arith.constant 0 : i32
    %c0_i32_1 = arith.constant 0 : i32
    return %c0_i32, %c0_i32_0 : i32, i32
  }
  func.func @transform_2(%arg0: i32) -> (i32, i32) {
    %c0_i32 = arith.constant 0 : i32
    %c0_i32_0 = arith.constant 0 : i32
    %c0_i32_1 = arith.constant 0 : i32
    return %c0_i32, %c0_i32_0 : i32, i32
  }
  func.func @transform_3(%arg0: i32) -> (i32, i32) {
    %c0_i32 = arith.constant 0 : i32
    %c0_i32_0 = arith.constant 0 : i32
    %c0_i32_1 = arith.constant 0 : i32
    return %c0_i32, %c0_i32_0 : i32, i32
  }
  func.func @transform_4(%arg0: i32) -> (i32, i32) {
    %c0_i32 = arith.constant 0 : i32
    %c0_i32_0 = arith.constant 0 : i32
    %c0_i32_1 = arith.constant 0 : i32
    return %c0_i32, %c0_i32_0 : i32, i32
  }
  func.func @transform_5(%arg0: i32) -> (i32, i32) {
    %c0_i32 = arith.constant 0 : i32
    %c0_i32_0 = arith.constant 0 : i32
    %c0_i32_1 = arith.constant 0 : i32
    return %c0_i32, %c0_i32_0 : i32, i32
  }
  func.func @transform_6(%arg0: i32) -> (i32, i32) {
    %c0_i32 = arith.constant 0 : i32
    %c0_i32_0 = arith.constant 0 : i32
    %c0_i32_1 = arith.constant 0 : i32
    return %c0_i32, %c0_i32_0 : i32, i32
  }
  func.func @transform_7(%arg0: i32) -> (i32, i32, i32) {
    %c0_i32 = arith.constant 0 : i32
    %c0_i32_0 = arith.constant 0 : i32
    %c0_i32_1 = arith.constant 0 : i32
    return %arg0, %c0_i32, %c0_i32_0 : i32, i32, i32
  }
}

</mosaic_0001>

<llo_original>
// kernel: tpu_custom_call.1
$region0: #{tpu_custom_call.1}
  #allocation0 [shape = 'u32[]', space=smem, size = 0x4, offset = 0x4, fixed_abs, tag = 'smem constant byte address 0x4 - core index']
  #allocation1 [shape = 'u32[144,128]{1,0:T(1,128)}', space=vmem, size = 0x12000, scoped, tag = 'internal scratch']
  #allocation2 [shape = 'f32[1,1]{1,0:T(1,128)S(1)}', space=vmem, size = 0x200, scoped, tag = 'scoped memory for tpu_custom_call.1']
  %s0 = inlined_call_operand.hbm [shape: f32[32,32], index: 0, kind: input, shape index: {}]
  %s1 = inlined_call_operand.hbm [shape: bf16[32,128], index: 1, kind: input, shape index: {}]
  %s2 = inlined_call_operand.vmem [shape: f32[1,128], index: 2, kind: input, shape index: {}]
  %s3 = inlined_call_operand.hbm [shape: bf16[128,128], index: 3, kind: input, shape index: {}]
  %s4 = inlined_call_operand.vmem [shape: f32[1,128], index: 4, kind: input, shape index: {}]
  %s5 = inlined_call_operand.vmem [shape: bf16[1,128], index: 5, kind: input, shape index: {}]
  %s6 = inlined_call_operand.<no memory space> [shape: f32[1,1], index: 6, kind: input, shape index: {}]
  %s7 = inlined_call_operand.hbm [shape: f32[2,1,16], index: 7, kind: output, shape index: {}]
  %s8 = sld [smem:[#allocation0]]
  $region73: #{tpu_custom_call.1} parent=0
    _
  %s10 = ssub.s32 1, %s8
  %s11 = scalar_select 0, %s10, %s8
  %v12 = vstv %s6
  %13 = vst [vmem:[#allocation2] sm:$0x1] %v12
  $region1: #{tpu_custom_call.1} parent=0
    #allocation3 [shape = 'u8[16384]{0}', space=vmem, size = 0x4000, scoped, tag = 'input window, operand 0']
    #allocation4 [shape = 's32[2]{0}', space=sflag, size = 0x8, scoped, tag = 'scoped memory for tpu_custom_call.1']
    #allocation5 [shape = 's32[2]{0}', space=sflag, size = 0x8, scoped, tag = 'scoped memory for tpu_custom_call.1']
    #allocation6 [shape = 'u8[8192]{0}', space=vmem, size = 0x2000, scoped, tag = 'input window, operand 1, single buffered']
    #allocation7 [shape = 's32[1]{0}', space=sflag, size = 0x4, scoped, tag = 'scoped memory for tpu_custom_call.1']
    #allocation8 [shape = 'u8[32768]{0}', space=vmem, size = 0x8000, scoped, tag = 'input window, operand 3, single buffered']
    #allocation9 [shape = 'u8[1024]{0}', space=vmem, size = 0x400, scoped, tag = 'output window, operand 0']
    %14 = vsyncpa [#allocation4], 0
    %s15 = scalar_lea.sflag [#allocation4], 1
    %16 = vsyncpa %s15, 0
    %17 = vsyncpa [#allocation7], 0
    %18 = vsyncpa [#allocation5], 0
    %s19 = scalar_lea.sflag [#allocation5], 1
    %20 = vsyncpa %s19, 0
    loop: start=0, step=1, limit=4
    $region2: #{tpu_custom_call.1} parent=1 // loop_pre_header
      _
    $region3: #{tpu_custom_call.1} parent=1 // loop_header
      %s22 = sphi 0, %s26
      %p23 = scmp.ge.s32.totalorder %s22, 4
      %s32 = sphi 0, %s34
      %s35 = sphi 0, %s32
      %s36 = sphi 0, %s35
      %s52 = sphi 0, %s36
      %s56 = sphi 0, %s56
      %s58 = sphi 0, %s56
      %s59 = sphi 0, %s58
      %s73 = sphi 0, %s59
      %s77 = sphi 0, %s77
      %s79 = sphi 0, %s77
      %s80 = sphi 0, %s79
      %s94 = sphi 0, %s80
      %s98 = sphi 0, %s98
      %s100 = sphi 0, %s98
      %s101 = sphi 0, %s100
      %s115 = sphi 0, %s101
      %s119 = sphi 0, %s119
      %s121 = sphi 0, %s119
      %s122 = sphi 0, %s121
      %s136 = sphi 0, %s122
      %s140 = sphi 0, %s140
      %s142 = sphi 0, %s140
      %s143 = sphi 0, %s142
      %s157 = sphi 0, %s143
      %s161 = sphi 0, %s161
      %s163 = sphi 0, %s161
      %s164 = sphi 0, %s163
      %s178 = sphi 0, %s164
      %s184 = sphi 0, %s186
      %s187 = sphi 0, %s184
      %s188 = sphi 0, %s187
      %s204 = sphi 0, %s188
    $region4: #{tpu_custom_call.1} parent=1 // loop_header_branch
      %25 = sbr.rel (%p23) target = $region8
    $region5: #{tpu_custom_call.1} parent=1 // loop_body
      %s27 = ssub.s32 %s22, 1
      %s28 = ssub.s32 %s22, 2
      %s29 = sadd.s32 %s22, 1
      %s30 = ssub.s32 %s22, %s29
      %p31 = scmp.eq.s32.totalorder %s30, 0
      %s33 = sadd.s32 %s32, 1
      %s34 = scalar_select %p31, %s32, %s33
      %p37 = pneg %p31
      %p38 = scmp.eq.s32.totalorder %s22, 1
      %p39 = por %p37, %p38
      %p40 = scmp.ne.s32.totalorder %s32, %s35
      %p41 = scmp.eq.s32.totalorder %s22, 0
      %p42 = por %p40, %p41
      %p43 = scmp.ne.s32.totalorder %s32, %s35
      %p44 = scmp.eq.s32.totalorder %s27, 1
      %p45 = por %p43, %p44
      %p46 = scmp.ne.s32.totalorder %s35, %s36
      %p47 = scmp.eq.s32.totalorder %s27, 0
      %p48 = por %p46, %p47
      %p49 = scmp.ne.s32.totalorder %s35, %s36
      %p50 = scmp.eq.s32.totalorder %s28, 1
      %p51 = por %p49, %p50
      %p53 = scmp.ne.s32.totalorder %s36, %s52
      %p54 = scmp.eq.s32.totalorder %s28, 0
      %p55 = por %p53, %p54
      %s57 = sadd.s32 %s56, 1
      %p60 = scmp.eq.s32.totalorder %s22, 1
      %p61 = scmp.ne.s32.totalorder %s56, %s58
      %p62 = scmp.eq.s32.totalorder %s22, 0
      %p63 = por %p61, %p62
      %p64 = scmp.ne.s32.totalorder %s56, %s58
      %p65 = scmp.eq.s32.totalorder %s27, 1
      %p66 = por %p64, %p65
      %p67 = scmp.ne.s32.totalorder %s58, %s59
      %p68 = scmp.eq.s32.totalorder %s27, 0
      %p69 = por %p67, %p68
      %p70 = scmp.ne.s32.totalorder %s58, %s59
      %p71 = scmp.eq.s32.totalorder %s28, 1
      %p72 = por %p70, %p71
      %p74 = scmp.ne.s32.totalorder %s59, %s73
      %p75 = scmp.eq.s32.totalorder %s28, 0
      %p76 = por %p74, %p75
      %s78 = sadd.s32 %s77, 1
      %p81 = scmp.eq.s32.totalorder %s22, 1
      %p82 = scmp.ne.s32.totalorder %s77, %s79
      %p83 = scmp.eq.s32.totalorder %s22, 0
      %p84 = por %p82, %p83
      %p85 = scmp.ne.s32.totalorder %s77, %s79
      %p86 = scmp.eq.s32.totalorder %s27, 1
      %p87 = por %p85, %p86
      %p88 = scmp.ne.s32.totalorder %s79, %s80
      %p89 = scmp.eq.s32.totalorder %s27, 0
      %p90 = por %p88, %p89
      %p91 = scmp.ne.s32.totalorder %s79, %s80
      %p92 = scmp.eq.s32.totalorder %s28, 1
      %p93 = por %p91, %p92
      %p95 = scmp.ne.s32.totalorder %s80, %s94
      %p96 = scmp.eq.s32.totalorder %s28, 0
      %p97 = por %p95, %p96
      %s99 = sadd.s32 %s98, 1
      %p102 = scmp.eq.s32.totalorder %s22, 1
      %p103 = scmp.ne.s32.totalorder %s98, %s100
      %p104 = scmp.eq.s32.totalorder %s22, 0
      %p105 = por %p103, %p104
      %p106 = scmp.ne.s32.totalorder %s98, %s100
      %p107 = scmp.eq.s32.totalorder %s27, 1
      %p108 = por %p106, %p107
      %p109 = scmp.ne.s32.totalorder %s100, %s101
      %p110 = scmp.eq.s32.totalorder %s27, 0
      %p111 = por %p109, %p110
      %p112 = scmp.ne.s32.totalorder %s100, %s101
      %p113 = scmp.eq.s32.totalorder %s28, 1
      %p114 = por %p112, %p113
      %p116 = scmp.ne.s32.totalorder %s101, %s115
      %p117 = scmp.eq.s32.totalorder %s28, 0
      %p118 = por %p116, %p117
      %s120 = sadd.s32 %s119, 1
      %p123 = scmp.eq.s32.totalorder %s22, 1
      %p124 = scmp.ne.s32.totalorder %s119, %s121
      %p125 = scmp.eq.s32.totalorder %s22, 0
      %p126 = por %p124, %p125
      %p127 = scmp.ne.s32.totalorder %s119, %s121
      %p128 = scmp.eq.s32.totalorder %s27, 1
      %p129 = por %p127, %p128
      %p130 = scmp.ne.s32.totalorder %s121, %s122
      %p131 = scmp.eq.s32.totalorder %s27, 0
      %p132 = por %p130, %p131
      %p133 = scmp.ne.s32.totalorder %s121, %s122
      %p134 = scmp.eq.s32.totalorder %s28, 1
      %p135 = por %p133, %p134
      %p137 = scmp.ne.s32.totalorder %s122, %s136
      %p138 = scmp.eq.s32.totalorder %s28, 0
      %p139 = por %p137, %p138
      %s141 = sadd.s32 %s140, 1
      %p144 = scmp.eq.s32.totalorder %s22, 1
      %p145 = scmp.ne.s32.totalorder %s140, %s142
      %p146 = scmp.eq.s32.totalorder %s22, 0
      %p147 = por %p145, %p146
      %p148 = scmp.ne.s32.totalorder %s140, %s142
      %p149 = scmp.eq.s32.totalorder %s27, 1
      %p150 = por %p148, %p149
      %p151 = scmp.ne.s32.totalorder %s142, %s143
      %p152 = scmp.eq.s32.totalorder %s27, 0
      %p153 = por %p151, %p152
      %p154 = scmp.ne.s32.totalorder %s142, %s143
      %p155 = scmp.eq.s32.totalorder %s28, 1
      %p156 = por %p154, %p155
      %p158 = scmp.ne.s32.totalorder %s143, %s157
      %p159 = scmp.eq.s32.totalorder %s28, 0
      %p160 = por %p158, %p159
      %s162 = sadd.s32 %s161, 1
      %p165 = scmp.eq.s32.totalorder %s22, 1
      %p166 = scmp.ne.s32.totalorder %s161, %s163
      %p167 = scmp.eq.s32.totalorder %s22, 0
      %p168 = por %p166, %p167
      %p169 = scmp.ne.s32.totalorder %s161, %s163
      %p170 = scmp.eq.s32.totalorder %s27, 1
      %p171 = por %p169, %p170
      %p172 = scmp.ne.s32.totalorder %s163, %s164
      %p173 = scmp.eq.s32.totalorder %s27, 0
      %p174 = por %p172, %p173
      %p175 = scmp.ne.s32.totalorder %s163, %s164
      %p176 = scmp.eq.s32.totalorder %s28, 1
      %p177 = por %p175, %p176
      %p179 = scmp.ne.s32.totalorder %s164, %s178
      %p180 = scmp.eq.s32.totalorder %s28, 0
      %p181 = por %p179, %p180
      %s182 = ssub.s32 %s22, %s29
      %p183 = scmp.eq.s32.totalorder %s182, 0
      %s185 = sadd.s32 %s184, 1
      %s186 = scalar_select %p183, %s184, %s185
      %p189 = pneg %p183
      %p190 = scmp.eq.s32.totalorder %s22, 1
      %p191 = por %p189, %p190
      %p192 = scmp.ne.s32.totalorder %s184, %s187
      %p193 = scmp.eq.s32.totalorder %s22, 0
      %p194 = por %p192, %p193
      %p195 = scmp.ne.s32.totalorder %s184, %s187
      %p196 = scmp.eq.s32.totalorder %s27, 1
      %p197 = por %p195, %p196
      %p198 = scmp.ne.s32.totalorder %s187, %s188
      %p199 = scmp.eq.s32.totalorder %s27, 0
      %p200 = por %p198, %p199
      %p201 = scmp.ne.s32.totalorder %s187, %s188
      %p202 = scmp.eq.s32.totalorder %s28, 1
      %p203 = por %p201, %p202
      %p205 = scmp.ne.s32.totalorder %s188, %s204
      %p206 = scmp.eq.s32.totalorder %s28, 0
      %p207 = por %p205, %p206
      %p208 = scmp.le.s32.totalorder 1, %s22
      %p209 = scmp.lt.s32.totalorder %s22, 3
      %p210 = pnand %p208, %p209
      %p211 = pneg %p210
      // Predicated region
      $region9: #{tpu_custom_call.1} parent=5 // pred_check
        _
      $region10: #{tpu_custom_call.1} parent=5 // pred_check_branch
        %213 = sbr.rel (%p210) target = $region12
      $region11: #{tpu_custom_call.1} parent=5 // pred_region
        %s214 = ssub.s32 %s22, 1
        // Predicated region
        $region13: #{tpu_custom_call.1} parent=11 // pred_check
          %p215 = pneg %p69
        $region14: #{tpu_custom_call.1} parent=11 // pred_check_branch
          %217 = sbr.rel (%p215) target = $region16
        $region15: #{tpu_custom_call.1} parent=11 // pred_region
          %s219 = ssub.s32 256, 256
          %220 = vsyncadd [#allocation7], %s219
          %s221 = sshll.u32 [#allocation6], 4
          %s222 = int_to_ptr.vmem [resolvable:$true] %s221
          %227 = dma.hbm_to_vmem [thread:$0]  %s1, 256, %s222, [#allocation7], 64, 64, 4
        $region16: #{tpu_custom_call.1} parent=11 // pred_fallthru
          _
        // Predicated region
        $region17: #{tpu_custom_call.1} parent=11 // pred_check
          %p228 = pneg %p90
        $region18: #{tpu_custom_call.1} parent=11 // pred_check_branch
          %230 = sbr.rel (%p228) target = $region20
        $region19: #{tpu_custom_call.1} parent=11 // pred_region
          _
        $region20: #{tpu_custom_call.1} parent=11 // pred_fallthru
          _
        // Predicated region
        $region21: #{tpu_custom_call.1} parent=11 // pred_check
          %p231 = pneg %p111
        $region22: #{tpu_custom_call.1} parent=11 // pred_check_branch
          %233 = sbr.rel (%p231) target = $region24
        $region23: #{tpu_custom_call.1} parent=11 // pred_region
          %s235 = ssub.s32 1024, 1024
          %236 = vsyncadd [#allocation7], %s235
          %s237 = sshll.u32 [#allocation8], 4
          %s238 = int_to_ptr.vmem [resolvable:$true] %s237
          %243 = dma.hbm_to_vmem [thread:$0]  %s3, 1024, %s238, [#allocation7], 64, 64, 4
        $region24: #{tpu_custom_call.1} parent=11 // pred_fallthru
          _
        // Predicated region
        $region25: #{tpu_custom_call.1} parent=11 // pred_check
          %p244 = pneg %p132
        $region26: #{tpu_custom_call.1} parent=11 // pred_check_branch
          %246 = sbr.rel (%p244) target = $region28
        $region27: #{tpu_custom_call.1} parent=11 // pred_region
          _
        $region28: #{tpu_custom_call.1} parent=11 // pred_fallthru
          _
        // Predicated region
        $region29: #{tpu_custom_call.1} parent=11 // pred_check
          %p247 = pneg %p153
        $region30: #{tpu_custom_call.1} parent=11 // pred_check_branch
          %249 = sbr.rel (%p247) target = $region32
        $region31: #{tpu_custom_call.1} parent=11 // pred_region
          _
        $region32: #{tpu_custom_call.1} parent=11 // pred_fallthru
          _
        // Predicated region
        $region33: #{tpu_custom_call.1} parent=11 // pred_check
          %p250 = pneg %p174
        $region34: #{tpu_custom_call.1} parent=11 // pred_check_branch
          %252 = sbr.rel (%p250) target = $region36
        $region35: #{tpu_custom_call.1} parent=11 // pred_region
          _
        $region36: #{tpu_custom_call.1} parent=11 // pred_fallthru
          _
      $region12: #{tpu_custom_call.1} parent=5 // pred_fallthru
        _
      %p253 = scmp.lt.s32.totalorder %s22, 2
      // Predicated region
      $region37: #{tpu_custom_call.1} parent=5 // pred_check
        %p254 = pneg %p253
      $region38: #{tpu_custom_call.1} parent=5 // pred_check_branch
        %256 = sbr.rel (%p254) target = $region40
      $region39: #{tpu_custom_call.1} parent=5 // pred_region
        // Predicated region
        $region41: #{tpu_custom_call.1} parent=39 // pred_check
          %p257 = pneg %p42
        $region42: #{tpu_custom_call.1} parent=39 // pred_check_branch
          %259 = sbr.rel (%p257) target = $region44
        $region43: #{tpu_custom_call.1} parent=39 // pred_region
          %s260 = sand.u32 %s32, 1
          %s261 = scalar_lea.sflag [#allocation4], %s260
          %s262 = sand.u32 %s32, 1
          %s263 = smul.addr %s262, 16
          %s264 = scalar_lea.vmem [#allocation3], %s263
          %s265 = smul.u32 2, %s22
          %s267 = ssub.s32 256, 256
          %268 = vsyncadd %s261, %s267
          %s269 = smul.addr %s265, 128
          %s270 = scalar_lea.hbm %s0, %s269
          %s271 = sshll.u32 %s264, 4
          %s272 = int_to_ptr.vmem [resolvable:$true] %s271
          %277 = dma.hbm_to_vmem [thread:$0]  %s270, 256, %s272, %s261, 128, 128, 8
        $region44: #{tpu_custom_call.1} parent=39 // pred_fallthru
          _
      $region40: #{tpu_custom_call.1} parent=5 // pred_fallthru
        _
      %p278 = scmp.le.s32.totalorder 1, %s22
      %p279 = scmp.lt.s32.totalorder %s22, 3
      %p280 = pnand %p278, %p279
      %p281 = pneg %p280
      // Predicated region
      $region45: #{tpu_custom_call.1} parent=5 // pred_check
        _
      $region46: #{tpu_custom_call.1} parent=5 // pred_check_branch
        %283 = sbr.rel (%p280) target = $region48
      $region47: #{tpu_custom_call.1} parent=5 // pred_region
        %s284 = ssub.s32 %s22, 1
        %s285 = sand.u32 %s35, 1
        %s286 = scalar_lea.sflag [#allocation4], %s285
        %s287 = sand.u32 %s35, 1
        %s288 = smul.addr %s287, 16
        %s289 = scalar_lea.vmem [#allocation3], %s288
        // Predicated region
        $region49: #{tpu_custom_call.1} parent=47 // pred_check
          %p290 = pneg %p48
        $region50: #{tpu_custom_call.1} parent=47 // pred_check_branch
          %292 = sbr.rel (%p290) target = $region52
        $region51: #{tpu_custom_call.1} parent=47 // pred_region
          %293 = dma.done %s286, 256
        $region52: #{tpu_custom_call.1} parent=47 // pred_fallthru
          _
        // Predicated region
        $region53: #{tpu_custom_call.1} parent=47 // pred_check
          %p294 = pneg %p69
        $region54: #{tpu_custom_call.1} parent=47 // pred_check_branch
          %296 = sbr.rel (%p294) target = $region56
        $region55: #{tpu_custom_call.1} parent=47 // pred_region
          %297 = dma.done [#allocation7], 256
        $region56: #{tpu_custom_call.1} parent=47 // pred_fallthru
          _
        // Predicated region
        $region57: #{tpu_custom_call.1} parent=47 // pred_check
          %p298 = pneg %p111
        $region58: #{tpu_custom_call.1} parent=47 // pred_check_branch
          %300 = sbr.rel (%p298) target = $region60
        $region59: #{tpu_custom_call.1} parent=47 // pred_region
          %301 = dma.done [#allocation7], 1024
        $region60: #{tpu_custom_call.1} parent=47 // pred_fallthru
          _
        %s302 = sand.u32 %s35, 1
        %s303 = scalar_lea.sflag [#allocation4], %s302
        %s304 = sand.u32 %s35, 1
        %s305 = smul.addr %s304, 16
        %s306 = scalar_lea.vmem [#allocation3], %s305
        %p307 = pneg %p48
        %p308 = pneg %p45
        %p309 = pneg %p69
        %p310 = pneg %p66
        %p311 = pneg %p90
        %p312 = pneg %p87
        %p313 = pneg %p111
        %p314 = pneg %p108
        %p315 = pneg %p132
        %p316 = pneg %p129
        %p317 = pneg %p153
        %p318 = pneg %p150
        %p319 = pneg %p174
        %p320 = pneg %p171
        %p321 = pneg %p200
        %p322 = pneg %p197
        %s323 = sand.u32 %s187, 1
        %s324 = scalar_lea.sflag [#allocation5], %s323
        %s325 = sand.u32 %s187, 1
        %s326 = scalar_lea.vmem [#allocation9], %s325
        %s327 = smul.u32 2, %s27
        %v329 = vld [vmem:[%s289] sm:$0xff]
        %v330 = vld [vmem:[%s289 + $0x8] sm:$0xff]
        %v331 = vpack.c.bf16 %v330, %v329
        %v332 = vld [vmem:[#allocation6] sm:$0xf]
        %v333 = vld [vmem:[#allocation6 + $0x4] sm:$0xf]
        %v334 = vld [vmem:[#allocation6 + $0x8] sm:$0xf]
        %v335 = vld [vmem:[#allocation6 + $0xc] sm:$0xf]
        %v336 = vld [vmem:[%s2] sm:$0x1]
        %v338 = vlaneseq
        %v339 = vshrl.u32 %v338, 7
        %v340 = vsub.s32 0, %v339
        %v341 = vrot.slane %v336, %v340
        %v347 = vunpack.c.l.b16 %v332
        %v348 = vunpack.c.l.b16 %v333
        %v349 = vunpack.c.l.b16 %v334
        %v350 = vunpack.c.l.b16 %v335
        %v351 = vpack.c.b16 %v348, %v347
        %v352 = vpack.c.b16 %v350, %v349
        %vm355 = vcmask 261120
        %v357 = vsel %vm355, %v331, 0
        %359 = vmatprep.subr.bf16.mxu0 0
        %360 = vmatpush1.bf16.msra.mxu0 %v351
        %361 = vmatprep.subr.bf16.mxu0 0
        %362 = vmatpush1.bf16.msra.mxu0 %v352
        %363 = vmatprep.subr.bf16.mxu0 0
        %364 = vmatpush1.bf16.msra.mxu0 0
        %365 = vmatprep.subr.bf16.mxu0 0
        %366 = vmatpush1.bf16.msra.mxu0 0
        %367 = vmatprep.subr.bf16.mxu0 0
        %368 = vmatpush1.bf16.msra.mxu0 0
        %369 = vmatprep.subr.bf16.mxu0 0
        %370 = vmatpush1.bf16.msra.mxu0 0
        %371 = vmatprep.subr.bf16.mxu0 0
        %372 = vmatpush1.bf16.msra.mxu0 0
        %373 = vmatprep.subr.bf16.mxu0 0
        %374 = vmatpush1.bf16.msra.mxu0 0
        %375 = vmatprep.subr.bf16.mxu0 0
        %376 = vmatpush1.bf16.msra.mxu0 0
        %377 = vmatprep.subr.bf16.mxu0 0
        %378 = vmatpush1.bf16.msra.mxu0 0
        %379 = vmatprep.subr.bf16.mxu0 0
        %380 = vmatpush1.bf16.msra.mxu0 0
        %381 = vmatprep.subr.bf16.mxu0 0
        %382 = vmatpush1.bf16.msra.mxu0 0
        %383 = vmatprep.subr.bf16.mxu0 0
        %384 = vmatpush1.bf16.msra.mxu0 0
        %385 = vmatprep.subr.bf16.mxu0 0
        %386 = vmatpush1.bf16.msra.mxu0 0
        %387 = vmatprep.subr.bf16.mxu0 0
        %388 = vmatpush1.bf16.msra.mxu0 0
        %389 = vmatprep.subr.bf16.mxu0 0
        %390 = vmatpush1.bf16.msra.mxu0 0
        %391 = vmatprep.mubr.bf16.mxu0 0
        %392 = vmatmul.mubr.bf16.gmra.mrb[0].mxu0 %v357
        %v393 = vpop.f32.mrb[0].mxu0
        %v394 = vadd.f32 %v341, %v393
        %v395 = vpop.f32.mrb[0].mxu0
        %v396 = vpop.f32.mrb[0].mxu0
        %v397 = vadd.f32 %v341, %v396
        %v398 = vpop.f32.mrb[0].mxu0
        %399 = vdwg.mxu0
        %v400 = vmul.f32 %v394, 0.2
        %v401 = vmul.f32 %v397, 0.2
        %v402 = vmax.f32 %v394, %v400
        %v403 = vmax.f32 %v397, %v401
        %v404 = vpack.c.bf16 %v403, %v402
        %v405 = vld [vmem:[#allocation8] sm:$0xf]
        %v406 = vld [vmem:[#allocation8 + $0x4] sm:$0xf]
        %v407 = vld [vmem:[#allocation8 + $0x8] sm:$0xf]
        %v408 = vld [vmem:[#allocation8 + $0xc] sm:$0xf]
        %v409 = vld [vmem:[#allocation8 + $0x10] sm:$0xf]
        %v410 = vld [vmem:[#allocation8 + $0x14] sm:$0xf]
        %v411 = vld [vmem:[#allocation8 + $0x18] sm:$0xf]
        %v412 = vld [vmem:[#allocation8 + $0x1c] sm:$0xf]
        %v413 = vld [vmem:[#allocation8 + $0x20] sm:$0xf]
        %v414 = vld [vmem:[#allocation8 + $0x24] sm:$0xf]
        %v415 = vld [vmem:[#allocation8 + $0x28] sm:$0xf]
        %v416 = vld [vmem:[#allocation8 + $0x2c] sm:$0xf]
        %v417 = vld [vmem:[#allocation8 + $0x30] sm:$0xf]
        %v418 = vld [vmem:[#allocation8 + $0x34] sm:$0xf]
        %v419 = vld [vmem:[#allocation8 + $0x38] sm:$0xf]
        %v420 = vld [vmem:[#allocation8 + $0x3c] sm:$0xf]
        %v421 = vld [vmem:[%s4] sm:$0x1]
        %v423 = vlaneseq
        %v424 = vshrl.u32 %v423, 7
        %v425 = vsub.s32 0, %v424
        %v426 = vrot.slane %v421, %v425
        %v444 = vunpack.c.l.b16 %v405
        %v445 = vunpack.c.l.b16 %v406
        %v446 = vunpack.c.l.b16 %v407
        %v447 = vunpack.c.l.b16 %v408
        %v448 = vunpack.c.l.b16 %v409
        %v449 = vunpack.c.l.b16 %v410
        %v450 = vunpack.c.l.b16 %v411
        %v451 = vunpack.c.l.b16 %v412
        %v452 = vunpack.c.l.b16 %v413
        %v453 = vunpack.c.l.b16 %v414
        %v454 = vunpack.c.l.b16 %v415
        %v455 = vunpack.c.l.b16 %v416
        %v456 = vunpack.c.l.b16 %v417
        %v457 = vunpack.c.l.b16 %v418
        %v458 = vunpack.c.l.b16 %v419
        %v459 = vunpack.c.l.b16 %v420
        %v460 = vpack.c.b16 %v445, %v444
        %v461 = vpack.c.b16 %v447, %v446
        %v462 = vpack.c.b16 %v449, %v448
        %v463 = vpack.c.b16 %v451, %v450
        %v464 = vpack.c.b16 %v453, %v452
        %v465 = vpack.c.b16 %v455, %v454
        %v466 = vpack.c.b16 %v457, %v456
        %v467 = vpack.c.b16 %v459, %v458
        %476 = vmatprep.subr.bf16.mxu0 0
        %477 = vmatpush1.bf16.msra.mxu0 %v460
        %478 = vmatprep.subr.bf16.mxu0 0
        %479 = vmatpush1.bf16.msra.mxu0 %v461
        %480 = vmatprep.subr.bf16.mxu0 0
        %481 = vmatpush1.bf16.msra.mxu0 %v462
        %482 = vmatprep.subr.bf16.mxu0 0
        %483 = vmatpush1.bf16.msra.mxu0 %v463
        %484 = vmatprep.subr.bf16.mxu0 0
        %485 = vmatpush1.bf16.msra.mxu0 %v464
        %486 = vmatprep.subr.bf16.mxu0 0
        %487 = vmatpush1.bf16.msra.mxu0 %v465
        %488 = vmatprep.subr.bf16.mxu0 0
        %489 = vmatpush1.bf16.msra.mxu0 %v466
        %490 = vmatprep.subr.bf16.mxu0 0
        %491 = vmatpush1.bf16.msra.mxu0 %v467
        %492 = vmatprep.subr.bf16.mxu0 0
        %493 = vmatpush1.bf16.msra.mxu0 0
        %494 = vmatprep.subr.bf16.mxu0 0
        %495 = vmatpush1.bf16.msra.mxu0 0
        %496 = vmatprep.subr.bf16.mxu0 0
        %497 = vmatpush1.bf16.msra.mxu0 0
        %498 = vmatprep.subr.bf16.mxu0 0
        %499 = vmatpush1.bf16.msra.mxu0 0
        %500 = vmatprep.subr.bf16.mxu0 0
        %501 = vmatpush1.bf16.msra.mxu0 0
        %502 = vmatprep.subr.bf16.mxu0 0
        %503 = vmatpush1.bf16.msra.mxu0 0
        %504 = vmatprep.subr.bf16.mxu0 0
        %505 = vmatpush1.bf16.msra.mxu0 0
        %506 = vmatprep.subr.bf16.mxu0 0
        %507 = vmatpush1.bf16.msra.mxu0 0
        %508 = vmatprep.mubr.bf16.mxu0 0
        %509 = vmatmul.mubr.bf16.gmra.mrb[0].mxu0 %v404
        %v510 = vpop.f32.mrb[0].mxu0
        %v511 = vadd.f32 %v426, %v510
        %v512 = vpop.f32.mrb[0].mxu0
        %v513 = vpop.f32.mrb[0].mxu0
        %v514 = vadd.f32 %v426, %v513
        %v515 = vpop.f32.mrb[0].mxu0
        %516 = vdwg.mxu0
        %v517 = vmul.f32 %v511, 0.2
        %v518 = vmul.f32 %v514, 0.2
        %v519 = vmax.f32 %v511, %v517
        %v520 = vmax.f32 %v514, %v518
        %v521 = vld [vmem:[%s5] sm:$0x1]
        %v522 = vpack.c.bf16 %v520, %v519
        %v523 = vld [vmem:[#allocation2] sm:$0x1]
        %525 = vset.pattern.permute.xlu0 0
        %526 = vperm.xlu0 %525, %v523
        %v527 = vpop.permute.xlu0 %526
        %v529 = vlaneseq
        %v530 = vshrl.u32 %v529, 7
        %v531 = vsub.s32 0, %v530
        %v532 = vrot.slane %v527, %v531
        %533 = vmatprep.subr.bf16.mxu0 0
        %534 = vmatpush1.bf16.xpose.msra.mxu0 %v522
        %535 = vmatprep.subr.bf16.mxu0 0
        %536 = vmatpush1.bf16.xpose.msra.mxu0 0
        %537 = vmatprep.subr.bf16.mxu0 0
        %538 = vmatpush1.bf16.xpose.msra.mxu0 0
        %539 = vmatprep.subr.bf16.mxu0 0
        %540 = vmatpush1.bf16.xpose.msra.mxu0 0
        %541 = vmatprep.subr.bf16.mxu0 0
        %542 = vmatpush1.bf16.xpose.msra.mxu0 0
        %543 = vmatprep.subr.bf16.mxu0 0
        %544 = vmatpush1.bf16.xpose.msra.mxu0 0
        %545 = vmatprep.subr.bf16.mxu0 0
        %546 = vmatpush1.bf16.xpose.msra.mxu0 0
        %547 = vmatprep.subr.bf16.mxu0 0
        %548 = vmatpush1.bf16.xpose.msra.mxu0 0
        %549 = vmatprep.subr.bf16.mxu0 0
        %550 = vmatpush1.bf16.xpose.msra.mxu0 0
        %551 = vmatprep.subr.bf16.mxu0 0
        %552 = vmatpush1.bf16.xpose.msra.mxu0 0
        %553 = vmatprep.subr.bf16.mxu0 0
        %554 = vmatpush1.bf16.xpose.msra.mxu0 0
        %555 = vmatprep.subr.bf16.mxu0 0
        %556 = vmatpush1.bf16.xpose.msra.mxu0 0
        %557 = vmatprep.subr.bf16.mxu0 0
        %558 = vmatpush1.bf16.xpose.msra.mxu0 0
        %559 = vmatprep.subr.bf16.mxu0 0
        %560 = vmatpush1.bf16.xpose.msra.mxu0 0
        %561 = vmatprep.subr.bf16.mxu0 0
        %562 = vmatpush1.bf16.xpose.msra.mxu0 0
        %563 = vmatprep.subr.bf16.mxu0 0
        %564 = vmatpush1.bf16.xpose.msra.mxu0 0
        %565 = vmatprep.mubr.bf16.mxu0 0
        %566 = vmatmul.mubr.bf16.gmra.mrb[0].mxu0 %v521
        %v567 = vpop.f32.mrb[0].mxu0
        %v568 = vadd.f32 %v532, %v567
        %v569 = vpop.f32.mrb[0].mxu0
        %v570 = vpop.f32.mrb[0].mxu0
        %v571 = vpop.f32.mrb[0].mxu0
        %572 = vdwg.mxu0
        %v573 = vsub.f32 0.0, %v568
        %v574 = vmul.f32 %v573, 1.442695
        %v575 = vpow.pop %v574
        %v576 = vadd.f32 %v575, 1.0
        %v577 = vrcp.pop %v576
        %vm578 = vcmask 122880
        %579 = vst.msk [vmem:[%s326] sm:$0x1] %vm578, %v577
        %s580 = sand.u32 %s187, 1
        %s581 = scalar_lea.sflag [#allocation5], %s580
        %s582 = sand.u32 %s187, 1
        %s583 = scalar_lea.vmem [#allocation9], %s582
        // Predicated region
        $region61: #{tpu_custom_call.1} parent=47 // pred_check
          %p584 = pneg %p197
        $region62: #{tpu_custom_call.1} parent=47 // pred_check_branch
          %586 = sbr.rel (%p584) target = $region64
        $region63: #{tpu_custom_call.1} parent=47 // pred_region
          %s588 = ssub.s32 16, 16
          %589 = vsyncadd %s581, %s588
          %s590 = smul.addr %s27, 16
          %s591 = scalar_lea.hbm %s7, %s590
          %s593 = sshll.u32 %s583, 4
          %s594 = int_to_ptr.vmem [resolvable:$true] %s593
          %596 = dma.vmem_to_hbm [thread:$0]  %s594, 16, %s591, %s581
        $region64: #{tpu_custom_call.1} parent=47 // pred_fallthru
          _
      $region48: #{tpu_custom_call.1} parent=5 // pred_fallthru
        _
      %p597 = scmp.le.s32.totalorder 2, %s22
      // Predicated region
      $region65: #{tpu_custom_call.1} parent=5 // pred_check
        %p598 = pneg %p597
      $region66: #{tpu_custom_call.1} parent=5 // pred_check_branch
        %600 = sbr.rel (%p598) target = $region68
      $region67: #{tpu_custom_call.1} parent=5 // pred_region
        %s601 = ssub.s32 %s22, 2
        // Predicated region
        $region69: #{tpu_custom_call.1} parent=67 // pred_check
          %p602 = pneg %p203
        $region70: #{tpu_custom_call.1} parent=67 // pred_check_branch
          %604 = sbr.rel (%p602) target = $region72
        $region71: #{tpu_custom_call.1} parent=67 // pred_region
          %s605 = sand.u32 %s188, 1
          %s606 = scalar_lea.sflag [#allocation5], %s605
          %s607 = sand.u32 %s188, 1
          %s608 = scalar_lea.vmem [#allocation9], %s607
          %609 = dma.done %s606, 16
        $region72: #{tpu_custom_call.1} parent=67 // pred_fallthru
          _
      $region68: #{tpu_custom_call.1} parent=5 // pred_fallthru
        _
    $region6: #{tpu_custom_call.1} parent=1 // loop_footer
      %s26 = sadd.s32 1, %s22
    $region7: #{tpu_custom_call.1} parent=1 // loop_footer_branch
      %21 = sbr.rel target = $region3
    $region8: #{tpu_custom_call.1} parent=1 // loop_exit
      _
    %610 = vsyncpa [#allocation4], 1
    %s611 = scalar_lea.sflag [#allocation4], 1
    %612 = vsyncpa %s611, 1
    %613 = vsyncpa [#allocation7], 1
    %614 = vsyncpa [#allocation5], 1
    %s615 = scalar_lea.sflag [#allocation5], 1
    %616 = vsyncpa %s615, 1

</llo_original>
